<compile_context>
chip_gen: v6e
topology: v6e:2x2x1
jax: 0.10.0
libtpu: 0.0.40
codegen_flags: <defaults>
</compile_context>

<pallas_src>
import functools

import jax
import jax.numpy as jnp
from jax.experimental import pallas as pl
from jax.experimental.pallas import tpu as pltpu


def _round_up(x, m):
    return (x + m - 1) // m * m


def heads_kernel(lh_ref, w1_ref, b1_ref, w2_ref, b2_ref, wn_ref, bn_ref,
                 cls_ref, ner_ref, acc_ref, *, inv_seq_len):
    """Grid = (B, num_S_tiles). lh_ref: (TQ, H) bf16 tile of one batch row."""
    s = pl.program_id(1)

    lh = lh_ref[...]                                         # (TQ, H) bf16

    # --- ner_head: flat 2-D MXU matmul, f32 accumulate, lane-dense store ---
    ner = jnp.dot(lh, wn_ref[...], preferred_element_type=jnp.float32)
    ner_ref[...] = (ner + bn_ref[...]).astype(ner_ref.dtype)

    # --- encoder pooling='mean' stand-in: f32 row-sum accumulated over S tiles ---
    @pl.when(s == 0)
    def _init():
        acc_ref[...] = jnp.zeros_like(acc_ref)

    acc_ref[...] += jnp.sum(lh.astype(jnp.float32), axis=0, keepdims=True)

    # --- classifier_A (Linear -> ReLU -> Linear) on the final sequence tile ---
    @pl.when(s == pl.num_programs(1) - 1)
    def _classify():
        emb = acc_ref[...] * inv_seq_len                     # (1, H) f32
        h = jnp.dot(emb, w1_ref[...],
                    preferred_element_type=jnp.float32) + b1_ref[...]
        h = jnp.maximum(h, 0.0)
        cls = jnp.dot(h, w2_ref[...],
                      preferred_element_type=jnp.float32) + b2_ref[...]
        cls_ref[...] = cls.astype(cls_ref.dtype)


def multi_task_forward(last_hidden, params, *, rows_tile=512):
    B, S, H = last_hidden.shape
    h2 = params["b1"].shape[-1]
    C = params["b2"].shape[-1]
    N = params["bn"].shape[-1]

    # Lane-dense (multiple-of-128) padded logit widths; sliced back below.
    Cp = _round_up(max(C, 128), 128)
    Np = _round_up(max(N, 128), 128)

    # Sequence tile: multiple of 8 sublanes, capped (fits v7x 64 MiB VMEM
    # with 2x buffering at real encoder sizes).
    TQ = min(rows_tile, _round_up(S, 8))
    S_pad = _round_up(S, TQ)
    n_s = S_pad // TQ

    # bf16 activations / NER weights: halves HBM bytes, MXU-native everywhere.
    lh = last_hidden.astype(jnp.bfloat16)
    if S_pad != S:
        lh = jnp.pad(lh, ((0, 0), (0, S_pad - S), (0, 0)))

    w1 = params["w1"]                                               # (H, h2) f32
    b1 = params["b1"]                                               # (1, h2) f32
    w2 = jnp.pad(params["w2"], ((0, 0), (0, Cp - C)))               # (h2, Cp) f32
    b2 = jnp.pad(params["b2"], ((0, 0), (0, Cp - C)))               # (1, Cp) f32
    wn = jnp.pad(params["wn"].astype(jnp.bfloat16),
                 ((0, 0), (0, Np - N)))                             # (H, Np) bf16
    bn = jnp.pad(params["bn"], ((0, 0), (0, Np - N)))               # (1, Np) f32

    const = lambda b, s: (0, 0)   # resident weights/biases: DMA'd once

    grid_spec = pltpu.PrefetchScalarGridSpec(
        num_scalar_prefetch=0,
        grid=(B, n_s),
        in_specs=[
            pl.BlockSpec((None, TQ, H), lambda b, s: (b, s, 0)),    # last_hidden tile
            pl.BlockSpec((H, h2), const),                           # w1
            pl.BlockSpec((1, h2), const),                           # b1
            pl.BlockSpec((h2, Cp), const),                          # w2
            pl.BlockSpec((1, Cp), const),                           # b2
            pl.BlockSpec((H, Np), const),                           # wn
            pl.BlockSpec((1, Np), const),                           # bn
        ],
        out_specs=(
            pl.BlockSpec((None, 1, Cp), lambda b, s: (b, 0, 0)),    # cls (resident over s)
            pl.BlockSpec((None, TQ, Np), lambda b, s: (b, s, 0)),   # ner
        ),
        scratch_shapes=[pltpu.VMEM((1, H), jnp.float32)],           # mean-pool accumulator
    )

    out_shapes = (
        jax.ShapeDtypeStruct((B, 1, Cp), jnp.float32),
        jax.ShapeDtypeStruct((B, S_pad, Np), jnp.float32),
    )

    cost = pl.CostEstimate(
        flops=2 * B * S_pad * H * Np + 2 * B * (H * h2 + h2 * Cp),
        transcendentals=0,
        bytes_accessed=(B * S_pad * H * 2            # bf16 activations in
                        + B * S_pad * Np * 4         # f32 NER logits out
                        + B * Cp * 4                 # f32 classifier logits out
                        + (H * h2 + h2 * Cp + H * Np) * 4),
    )

    cls_p, ner_p = pl.pallas_call(
        functools.partial(heads_kernel, inv_seq_len=1.0 / S),
        out_shape=out_shapes,
        grid_spec=grid_spec,
        compiler_params=pltpu.CompilerParams(
            dimension_semantics=("parallel", "arbitrary"),
            vmem_limit_bytes=48 * 1024 * 1024,
        ),
        cost_estimate=cost,
    )(lh, w1, b1, w2, b2, wn, bn)

    # Strip lane padding / sequence padding.
    return cls_p[:, 0, :C], ner_p[:, :S, :N]


def init_params(key, hidden_size, num_classes, num_ner_labels):
    """Deterministic PyTorch-style (uniform +/- 1/sqrt(fan_in)) init."""
    h2 = hidden_size // 2
    ks = jax.random.split(key, 6)

    def lin(kw, kb, fan_in, fan_out):
        bound = 1.0 / jnp.sqrt(fan_in)
        w = jax.random.uniform(kw, (fan_in, fan_out), jnp.float32, -bound, bound)
        b = jax.random.uniform(kb, (1, fan_out), jnp.float32, -bound, bound)
        return w, b

    w1, b1 = lin(ks[0], ks[1], hidden_size, h2)
    w2, b2 = lin(ks[2], ks[3], h2, num_classes)
    wn, bn = lin(ks[4], ks[5], hidden_size, num_ner_labels)
    return {"w1": w1, "b1": b1, "w2": w2, "b2": b2, "wn": wn, "bn": bn}


def reference_forward(last_hidden, p):
    """Pure-JAX reference matching the kernel's bf16-activation numerics."""
    lh_bf16 = last_hidden.astype(jnp.bfloat16)
    emb = jnp.sum(lh_bf16.astype(jnp.float32), axis=1) / last_hidden.shape[1]
    h = jnp.maximum(emb @ p["w1"] + p["b1"], 0.0)
    cls = h @ p["w2"] + p["b2"]
    ner = jnp.einsum('bsh,hn->bsn', lh_bf16, p["wn"].astype(jnp.bfloat16),
                     preferred_element_type=jnp.float32) + p["bn"][None]
    return cls, ner


if __name__ == "__main__":
    B, S, H = 2, 8, 32
    NUM_CLASSES, NUM_NER = 4, 9

    key = jax.random.PRNGKey(0)
    k_act, k_param = jax.random.split(key)

    # TODO(synk): the real encoder consumes list[str]; synthetic activations stand in here.
    last_hidden = jax.random.normal(k_act, (B, S, H), jnp.float32)
    params = init_params(k_param, H, NUM_CLASSES, NUM_NER)

    logits_cls, logits_ner = multi_task_forward(last_hidden, params)
    jax.block_until_ready((logits_cls, logits_ner))

    ref_cls, ref_ner = reference_forward(last_hidden, params)
    assert logits_cls.shape == (B, NUM_CLASSES)
    assert logits_ner.shape == (B, S, NUM_NER)
    assert jnp.allclose(logits_cls, ref_cls, atol=1e-2, rtol=1e-2)
    assert jnp.allclose(logits_ner, ref_ner, atol=1e-2, rtol=1e-2)

    print("KERNEL_OK")
</pallas_src>

<mosaic_0001>
module attributes {stable_mosaic.version = 11 : i64} {
  func.func @heads_kernel(%arg0: i32, %arg1: i32, %arg2: memref<1x8x32xbf16, #tpu.memory_space<vmem>>, %arg3: memref<32x16xf32, #tpu.memory_space<vmem>>, %arg4: memref<1x16xf32, #tpu.memory_space<vmem>>, %arg5: memref<16x128xf32, #tpu.memory_space<vmem>>, %arg6: memref<1x128xf32, #tpu.memory_space<vmem>>, %arg7: memref<32x128xbf16, #tpu.memory_space<vmem>>, %arg8: memref<1x128xf32, #tpu.memory_space<vmem>>, %arg9: memref<1x1x128xf32, #tpu.memory_space<vmem>>, %arg10: memref<1x8x128xf32, #tpu.memory_space<vmem>>, %arg11: memref<1x32xf32, #tpu.memory_space<vmem>>) attributes {dimension_semantics = [#tpu.dimension_semantics<parallel>, #tpu.dimension_semantics<arbitrary>], iteration_bounds = array<i64: 2, 1>, scalar_prefetch = 0 : i64, scratch_operands = 1 : i64, tpu.core_type = #tpu.core_type<tc>, window_params = [{transform_indices = @transform_0, window_bounds = array<i64: 1, 8, 32>}, {pipeline_mode = #tpu.pipeline_mode<synchronous>, transform_indices = @transform_1, window_bounds = array<i64: 32, 16>}, {pipeline_mode = #tpu.pipeline_mode<synchronous>, transform_indices = @transform_2, window_bounds = array<i64: 1, 16>}, {pipeline_mode = #tpu.pipeline_mode<synchronous>, transform_indices = @transform_3, window_bounds = array<i64: 16, 128>}, {pipeline_mode = #tpu.pipeline_mode<synchronous>, transform_indices = @transform_4, window_bounds = array<i64: 1, 128>}, {pipeline_mode = #tpu.pipeline_mode<synchronous>, transform_indices = @transform_5, window_bounds = array<i64: 32, 128>}, {pipeline_mode = #tpu.pipeline_mode<synchronous>, transform_indices = @transform_6, window_bounds = array<i64: 1, 128>}, {transform_indices = @transform_7, window_bounds = array<i64: 1, 1, 128>}, {transform_indices = @transform_8, window_bounds = array<i64: 1, 8, 128>}]} {
    %c0 = arith.constant 0 : index
    %c0_0 = arith.constant 0 : index
    %c0_1 = arith.constant 0 : index
    %0 = vector.load %arg2[%c0, %c0_0, %c0_1] : memref<1x8x32xbf16, #tpu.memory_space<vmem>>, vector<1x8x32xbf16>
    %1 = vector.shape_cast %0 : vector<1x8x32xbf16> to vector<8x32xbf16>
    %c0_2 = arith.constant 0 : index
    %c0_3 = arith.constant 0 : index
    %2 = vector.load %arg7[%c0_2, %c0_3] : memref<32x128xbf16, #tpu.memory_space<vmem>>, vector<32x128xbf16>
    %cst = arith.constant dense<0.000000e+00> : vector<8x128xf32>
    %3 = tpu.matmul %1, %2, %cst {dimension_numbers = #tpu.dot_dimension_numbers<[1], [0], [0], [1], [0, 0, 1, 1], [], []>} : vector<8x32xbf16>, vector<32x128xbf16>, vector<8x128xf32> -> vector<8x128xf32>
    %c0_4 = arith.constant 0 : index
    %c0_5 = arith.constant 0 : index
    %4 = vector.load %arg8[%c0_4, %c0_5] : memref<1x128xf32, #tpu.memory_space<vmem>>, vector<1x128xf32>
    %5 = vector.broadcast %4 : vector<1x128xf32> to vector<8x128xf32>
    %6 = arith.addf %3, %5 : vector<8x128xf32>
    %c0_6 = arith.constant 0 : index
    %c0_7 = arith.constant 0 : index
    %c0_8 = arith.constant 0 : index
    %7 = vector.load %arg10[%c0_6, %c0_7, %c0_8] : memref<1x8x128xf32, #tpu.memory_space<vmem>>, vector<1x8x128xf32>
    %8 = vector.shape_cast %7 : vector<1x8x128xf32> to vector<8x128xf32>
    %9 = vector.shape_cast %6 : vector<8x128xf32> to vector<1x8x128xf32>
    tpu.vector_store %arg10[%c0_6, %c0_7, %c0_8], %9 {strides = array<i32>} : memref<1x8x128xf32, #tpu.memory_space<vmem>>, vector<1x8x128xf32>,
    %c0_i32 = arith.constant 0 : i32
    %10 = arith.cmpi eq, %arg1, %c0_i32 : i32
    %11 = arith.extui %10 : i1 to i32
    %c0_i32_9 = arith.constant 0 : i32
    %12 = arith.cmpi ne, %11, %c0_i32_9 : i32
    scf.if %12 {
      %cst_17 = arith.constant 0.000000e+00 : f32
      %22 = vector.broadcast %cst_17 : f32 to vector<1x32xf32>
      %c0_18 = arith.constant 0 : index
      %c0_19 = arith.constant 0 : index
      %23 = vector.load %arg11[%c0_18, %c0_19] : memref<1x32xf32, #tpu.memory_space<vmem>>, vector<1x32xf32>
      tpu.vector_store %arg11[%c0_18, %c0_19], %22 {strides = array<i32>} : memref<1x32xf32, #tpu.memory_space<vmem>>, vector<1x32xf32>,
    } else {
    }
    %c0_10 = arith.constant 0 : index
    %c0_11 = arith.constant 0 : index
    %13 = vector.load %arg11[%c0_10, %c0_11] : memref<1x32xf32, #tpu.memory_space<vmem>>, vector<1x32xf32>
    %14 = arith.extf %1 : vector<8x32xbf16> to vector<8x32xf32>
    %cst_12 = arith.constant dense<0.000000e+00> : vector<32xf32>
    %15 = vector.multi_reduction <add>, %14, %cst_12 [0] : vector<8x32xf32> to vector<32xf32>
    %16 = vector.shape_cast %15 : vector<32xf32> to vector<1x32xf32>
    %17 = arith.addf %13, %16 : vector<1x32xf32>
    %c0_13 = arith.constant 0 : index
    %c0_14 = arith.constant 0 : index
    %18 = vector.load %arg11[%c0_13, %c0_14] : memref<1x32xf32, #tpu.memory_space<vmem>>, vector<1x32xf32>
    tpu.vector_store %arg11[%c0_13, %c0_14], %17 {strides = array<i32>} : memref<1x32xf32, #tpu.memory_space<vmem>>, vector<1x32xf32>,
    %c0_i32_15 = arith.constant 0 : i32
    %19 = arith.cmpi eq, %arg1, %c0_i32_15 : i32
    %20 = arith.extui %19 : i1 to i32
    %c0_i32_16 = arith.constant 0 : i32
    %21 = arith.cmpi ne, %20, %c0_i32_16 : i32
    scf.if %21 {
      %c0_17 = arith.constant 0 : index
      %c0_18 = arith.constant 0 : index
      %22 = vector.load %arg11[%c0_17, %c0_18] : memref<1x32xf32, #tpu.memory_space<vmem>>, vector<1x32xf32>
      %cst_19 = arith.constant 1.250000e-01 : f32
      %23 = vector.broadcast %cst_19 : f32 to vector<1x32xf32>
      %24 = arith.mulf %22, %23 : vector<1x32xf32>
      %c0_20 = arith.constant 0 : index
      %c0_21 = arith.constant 0 : index
      %25 = vector.load %arg3[%c0_20, %c0_21] : memref<32x16xf32, #tpu.memory_space<vmem>>, vector<32x16xf32>
      %cst_22 = arith.constant dense<0.000000e+00> : vector<1x16xf32>
      %26 = tpu.matmul %24, %25, %cst_22 {dimension_numbers = #tpu.dot_dimension_numbers<[1], [0], [0], [1], [0, 0, 1, 1], [], []>} : vector<1x32xf32>, vector<32x16xf32>, vector<1x16xf32> -> vector<1x16xf32>
      %c0_23 = arith.constant 0 : index
      %c0_24 = arith.constant 0 : index
      %27 = vector.load %arg4[%c0_23, %c0_24] : memref<1x16xf32, #tpu.memory_space<vmem>>, vector<1x16xf32>
      %28 = arith.addf %26, %27 : vector<1x16xf32>
      %cst_25 = arith.constant 0.000000e+00 : f32
      %29 = vector.broadcast %cst_25 : f32 to vector<1x16xf32>
      %30 = arith.maximumf %28, %29 : vector<1x16xf32>
      %c0_26 = arith.constant 0 : index
      %c0_27 = arith.constant 0 : index
      %31 = vector.load %arg5[%c0_26, %c0_27] : memref<16x128xf32, #tpu.memory_space<vmem>>, vector<16x128xf32>
      %cst_28 = arith.constant dense<0.000000e+00> : vector<1x128xf32>
      %32 = tpu.matmul %30, %31, %cst_28 {dimension_numbers = #tpu.dot_dimension_numbers<[1], [0], [0], [1], [0, 0, 1, 1], [], []>} : vector<1x16xf32>, vector<16x128xf32>, vector<1x128xf32> -> vector<1x128xf32>
      %c0_29 = arith.constant 0 : index
      %c0_30 = arith.constant 0 : index
      %33 = vector.load %arg6[%c0_29, %c0_30] : memref<1x128xf32, #tpu.memory_space<vmem>>, vector<1x128xf32>
      %34 = arith.addf %32, %33 : vector<1x128xf32>
      %c0_31 = arith.constant 0 : index
      %c0_32 = arith.constant 0 : index
      %c0_33 = arith.constant 0 : index
      %35 = vector.load %arg9[%c0_31, %c0_32, %c0_33] : memref<1x1x128xf32, #tpu.memory_space<vmem>>, vector<1x1x128xf32>
      %36 = vector.shape_cast %35 : vector<1x1x128xf32> to vector<1x128xf32>
      %37 = vector.shape_cast %34 : vector<1x128xf32> to vector<1x1x128xf32>
      tpu.vector_store %arg9[%c0_31, %c0_32, %c0_33], %37 {strides = array<i32>} : memref<1x1x128xf32, #tpu.memory_space<vmem>>, vector<1x1x128xf32>,
    } else {
    }
    return
  }
  func.func @transform_0(%arg0: i32, %arg1: i32) -> (i32, i32, i32) {
    %c0_i32 = arith.constant 0 : i32
    %c0_i32_0 = arith.constant 0 : i32
    return %arg0, %arg1, %c0_i32 : i32, i32, i32
  }
  func.func @transform_1(%arg0: i32, %arg1: i32) -> (i32, i32) {
    %c0_i32 = arith.constant 0 : i32
    %c0_i32_0 = arith.constant 0 : i32
    %c0_i32_1 = arith.constant 0 : i32
    return %c0_i32, %c0_i32_0 : i32, i32
  }
  func.func @transform_2(%arg0: i32, %arg1: i32) -> (i32, i32) {
    %c0_i32 = arith.constant 0 : i32
    %c0_i32_0 = arith.constant 0 : i32
    %c0_i32_1 = arith.constant 0 : i32
    return %c0_i32, %c0_i32_0 : i32, i32
  }
  func.func @transform_3(%arg0: i32, %arg1: i32) -> (i32, i32) {
    %c0_i32 = arith.constant 0 : i32
    %c0_i32_0 = arith.constant 0 : i32
    %c0_i32_1 = arith.constant 0 : i32
    return %c0_i32, %c0_i32_0 : i32, i32
  }
  func.func @transform_4(%arg0: i32, %arg1: i32) -> (i32, i32) {
    %c0_i32 = arith.constant 0 : i32
    %c0_i32_0 = arith.constant 0 : i32
    %c0_i32_1 = arith.constant 0 : i32
    return %c0_i32, %c0_i32_0 : i32, i32
  }
  func.func @transform_5(%arg0: i32, %arg1: i32) -> (i32, i32) {
    %c0_i32 = arith.constant 0 : i32
    %c0_i32_0 = arith.constant 0 : i32
    %c0_i32_1 = arith.constant 0 : i32
    return %c0_i32, %c0_i32_0 : i32, i32
  }
  func.func @transform_6(%arg0: i32, %arg1: i32) -> (i32, i32) {
    %c0_i32 = arith.constant 0 : i32
    %c0_i32_0 = arith.constant 0 : i32
    %c0_i32_1 = arith.constant 0 : i32
    return %c0_i32, %c0_i32_0 : i32, i32
  }
  func.func @transform_7(%arg0: i32, %arg1: i32) -> (i32, i32, i32) {
    %c0_i32 = arith.constant 0 : i32
    %c0_i32_0 = arith.constant 0 : i32
    %c0_i32_1 = arith.constant 0 : i32
    return %arg0, %c0_i32, %c0_i32_0 : i32, i32, i32
  }
  func.func @transform_8(%arg0: i32, %arg1: i32) -> (i32, i32, i32) {
    %c0_i32 = arith.constant 0 : i32
    %c0_i32_0 = arith.constant 0 : i32
    return %arg0, %arg1, %c0_i32 : i32, i32, i32
  }
}

</mosaic_0001>

<llo_original>
// kernel: tpu_custom_call.1
$region0: #{tpu_custom_call.1}
  #allocation0 [shape = 'u32[]', space=smem, size = 0x4, offset = 0x4, fixed_abs, tag = 'smem constant byte address 0x4 - core index']
  #allocation1 [shape = 'u32[144,128]{1,0:T(1,128)}', space=vmem, size = 0x12000, scoped, tag = 'internal scratch']
  #allocation2 [shape = 'f32[1,32]{1,0:T(1,128)}', space=vmem, size = 0x200, scoped, tag = 'scratch operand']
  %s0 = inlined_call_operand.vmem [shape: bf16[2,8,32], index: 0, kind: input, shape index: {}]
  %s1 = inlined_call_operand.vmem [shape: f32[32,16], index: 1, kind: input, shape index: {}]
  %s2 = inlined_call_operand.vmem [shape: f32[1,16], index: 2, kind: input, shape index: {}]
  %s3 = inlined_call_operand.vmem [shape: f32[16,128], index: 3, kind: input, shape index: {}]
  %s4 = inlined_call_operand.vmem [shape: f32[1,128], index: 4, kind: input, shape index: {}]
  %s5 = inlined_call_operand.vmem [shape: bf16[32,128], index: 5, kind: input, shape index: {}]
  %s6 = inlined_call_operand.vmem [shape: f32[1,128], index: 6, kind: input, shape index: {}]
  %s7 = inlined_call_operand.hbm [shape: f32[2,1,128], index: 7, kind: output, shape index: {0}]
  %s8 = inlined_call_operand.hbm [shape: f32[2,8,128], index: 8, kind: output, shape index: {1}]
  %9 = xla_tuple %s7, %s8
  %s10 = sld [smem:[#allocation0]]
  $region77: #{tpu_custom_call.1} parent=0
    _
  %s12 = ssub.s32 1, %s10
  %s13 = scalar_select 0, %s12, %s10
  $region1: #{tpu_custom_call.1} parent=0
    #allocation3 [shape = 'u8[1024]{0}', space=vmem, size = 0x400, scoped, tag = 'output window, operand 0']
    #allocation4 [shape = 's32[2]{0}', space=sflag, size = 0x8, scoped, tag = 'scoped memory for tpu_custom_call.1']
    #allocation5 [shape = 'u8[8192]{0}', space=vmem, size = 0x2000, scoped, tag = 'output window, operand 1']
    #allocation6 [shape = 's32[2]{0}', space=sflag, size = 0x8, scoped, tag = 'scoped memory for tpu_custom_call.1']
    %14 = vsyncpa [#allocation4], 0
    %s15 = scalar_lea.sflag [#allocation4], 1
    %16 = vsyncpa %s15, 0
    %17 = vsyncpa [#allocation6], 0
    %s18 = scalar_lea.sflag [#allocation6], 1
    %19 = vsyncpa %s18, 0
    loop: start=0, step=1, limit=4
    $region2: #{tpu_custom_call.1} parent=1 // loop_pre_header
      _
    $region3: #{tpu_custom_call.1} parent=1 // loop_header
      %s21 = sphi 0, %s25
      %p22 = scmp.ge.s32.totalorder %s21, 4
      %s28 = sphi 0, %s40
      %s29 = sphi 0, %s36
      %s30 = sphi 0, %s28
      %s31 = sphi 0, %s29
      %s32 = sphi 0, %s30
      %s33 = sphi 0, %s31
      %s45 = sphi 0, %s47
      %s48 = sphi 0, %s45
      %s49 = sphi 0, %s48
      %s65 = sphi 0, %s49
      %s69 = sphi 0, %s69
      %s71 = sphi 0, %s69
      %s72 = sphi 0, %s71
      %s86 = sphi 0, %s72
      %s90 = sphi 0, %s90
      %s92 = sphi 0, %s90
      %s93 = sphi 0, %s92
      %s107 = sphi 0, %s93
      %s111 = sphi 0, %s111
      %s113 = sphi 0, %s111
      %s114 = sphi 0, %s113
      %s128 = sphi 0, %s114
      %s132 = sphi 0, %s132
      %s134 = sphi 0, %s132
      %s135 = sphi 0, %s134
      %s149 = sphi 0, %s135
      %s153 = sphi 0, %s153
      %s155 = sphi 0, %s153
      %s156 = sphi 0, %s155
      %s170 = sphi 0, %s156
      %s174 = sphi 0, %s174
      %s176 = sphi 0, %s174
      %s177 = sphi 0, %s176
      %s191 = sphi 0, %s177
      %s197 = sphi 0, %s199
      %s200 = sphi 0, %s197
      %s201 = sphi 0, %s200
      %s217 = sphi 0, %s201
      %s225 = sphi 0, %s227
      %s228 = sphi 0, %s225
      %s229 = sphi 0, %s228
      %s245 = sphi 0, %s229
    $region4: #{tpu_custom_call.1} parent=1 // loop_header_branch
      %24 = sbr.rel (%p22) target = $region8
    $region5: #{tpu_custom_call.1} parent=1 // loop_body
      %s26 = ssub.s32 %s21, 1
      %s27 = ssub.s32 %s21, 2
      %s34 = sadd.s32 1, %s29
      %p35 = scmp.ge.s32.totalorder %s34, 1
      %s36 = scalar_select %p35, 0, %s34
      %s37 = sadd.s32 1, %s28
      %s38 = scalar_select %p35, %s37, %s28
      %p39 = scmp.ge.s32.totalorder %s38, 2
      %s40 = scalar_select %p39, 0, %s38
      %s41 = ssub.s32 %s28, %s40
      %s42 = ssub.s32 %s29, %s36
      %s43 = sor.u32 %s41, %s42
      %p44 = scmp.eq.s32.totalorder %s43, 0
      %s46 = sadd.s32 %s45, 1
      %s47 = scalar_select %p44, %s45, %s46
      %p50 = pneg %p44
      %p51 = scmp.eq.s32.totalorder %s21, 1
      %p52 = por %p50, %p51
      %p53 = scmp.ne.s32.totalorder %s45, %s48
      %p54 = scmp.eq.s32.totalorder %s21, 0
      %p55 = por %p53, %p54
      %p56 = scmp.ne.s32.totalorder %s45, %s48
      %p57 = scmp.eq.s32.totalorder %s26, 1
      %p58 = por %p56, %p57
      %p59 = scmp.ne.s32.totalorder %s48, %s49
      %p60 = scmp.eq.s32.totalorder %s26, 0
      %p61 = por %p59, %p60
      %p62 = scmp.ne.s32.totalorder %s48, %s49
      %p63 = scmp.eq.s32.totalorder %s27, 1
      %p64 = por %p62, %p63
      %p66 = scmp.ne.s32.totalorder %s49, %s65
      %p67 = scmp.eq.s32.totalorder %s27, 0
      %p68 = por %p66, %p67
      %s70 = sadd.s32 %s69, 1
      %p73 = scmp.eq.s32.totalorder %s21, 1
      %p74 = scmp.ne.s32.totalorder %s69, %s71
      %p75 = scmp.eq.s32.totalorder %s21, 0
      %p76 = por %p74, %p75
      %p77 = scmp.ne.s32.totalorder %s69, %s71
      %p78 = scmp.eq.s32.totalorder %s26, 1
      %p79 = por %p77, %p78
      %p80 = scmp.ne.s32.totalorder %s71, %s72
      %p81 = scmp.eq.s32.totalorder %s26, 0
      %p82 = por %p80, %p81
      %p83 = scmp.ne.s32.totalorder %s71, %s72
      %p84 = scmp.eq.s32.totalorder %s27, 1
      %p85 = por %p83, %p84
      %p87 = scmp.ne.s32.totalorder %s72, %s86
      %p88 = scmp.eq.s32.totalorder %s27, 0
      %p89 = por %p87, %p88
      %s91 = sadd.s32 %s90, 1
      %p94 = scmp.eq.s32.totalorder %s21, 1
      %p95 = scmp.ne.s32.totalorder %s90, %s92
      %p96 = scmp.eq.s32.totalorder %s21, 0
      %p97 = por %p95, %p96
      %p98 = scmp.ne.s32.totalorder %s90, %s92
      %p99 = scmp.eq.s32.totalorder %s26, 1
      %p100 = por %p98, %p99
      %p101 = scmp.ne.s32.totalorder %s92, %s93
      %p102 = scmp.eq.s32.totalorder %s26, 0
      %p103 = por %p101, %p102
      %p104 = scmp.ne.s32.totalorder %s92, %s93
      %p105 = scmp.eq.s32.totalorder %s27, 1
      %p106 = por %p104, %p105
      %p108 = scmp.ne.s32.totalorder %s93, %s107
      %p109 = scmp.eq.s32.totalorder %s27, 0
      %p110 = por %p108, %p109
      %s112 = sadd.s32 %s111, 1
      %p115 = scmp.eq.s32.totalorder %s21, 1
      %p116 = scmp.ne.s32.totalorder %s111, %s113
      %p117 = scmp.eq.s32.totalorder %s21, 0
      %p118 = por %p116, %p117
      %p119 = scmp.ne.s32.totalorder %s111, %s113
      %p120 = scmp.eq.s32.totalorder %s26, 1
      %p121 = por %p119, %p120
      %p122 = scmp.ne.s32.totalorder %s113, %s114
      %p123 = scmp.eq.s32.totalorder %s26, 0
      %p124 = por %p122, %p123
      %p125 = scmp.ne.s32.totalorder %s113, %s114
      %p126 = scmp.eq.s32.totalorder %s27, 1
      %p127 = por %p125, %p126
      %p129 = scmp.ne.s32.totalorder %s114, %s128
      %p130 = scmp.eq.s32.totalorder %s27, 0
      %p131 = por %p129, %p130
      %s133 = sadd.s32 %s132, 1
      %p136 = scmp.eq.s32.totalorder %s21, 1
      %p137 = scmp.ne.s32.totalorder %s132, %s134
      %p138 = scmp.eq.s32.totalorder %s21, 0
      %p139 = por %p137, %p138
      %p140 = scmp.ne.s32.totalorder %s132, %s134
      %p141 = scmp.eq.s32.totalorder %s26, 1
      %p142 = por %p140, %p141
      %p143 = scmp.ne.s32.totalorder %s134, %s135
      %p144 = scmp.eq.s32.totalorder %s26, 0
      %p145 = por %p143, %p144
      %p146 = scmp.ne.s32.totalorder %s134, %s135
      %p147 = scmp.eq.s32.totalorder %s27, 1
      %p148 = por %p146, %p147
      %p150 = scmp.ne.s32.totalorder %s135, %s149
      %p151 = scmp.eq.s32.totalorder %s27, 0
      %p152 = por %p150, %p151
      %s154 = sadd.s32 %s153, 1
      %p157 = scmp.eq.s32.totalorder %s21, 1
      %p158 = scmp.ne.s32.totalorder %s153, %s155
      %p159 = scmp.eq.s32.totalorder %s21, 0
      %p160 = por %p158, %p159
      %p161 = scmp.ne.s32.totalorder %s153, %s155
      %p162 = scmp.eq.s32.totalorder %s26, 1
      %p163 = por %p161, %p162
      %p164 = scmp.ne.s32.totalorder %s155, %s156
      %p165 = scmp.eq.s32.totalorder %s26, 0
      %p166 = por %p164, %p165
      %p167 = scmp.ne.s32.totalorder %s155, %s156
      %p168 = scmp.eq.s32.totalorder %s27, 1
      %p169 = por %p167, %p168
      %p171 = scmp.ne.s32.totalorder %s156, %s170
      %p172 = scmp.eq.s32.totalorder %s27, 0
      %p173 = por %p171, %p172
      %s175 = sadd.s32 %s174, 1
      %p178 = scmp.eq.s32.totalorder %s21, 1
      %p179 = scmp.ne.s32.totalorder %s174, %s176
      %p180 = scmp.eq.s32.totalorder %s21, 0
      %p181 = por %p179, %p180
      %p182 = scmp.ne.s32.totalorder %s174, %s176
      %p183 = scmp.eq.s32.totalorder %s26, 1
      %p184 = por %p182, %p183
      %p185 = scmp.ne.s32.totalorder %s176, %s177
      %p186 = scmp.eq.s32.totalorder %s26, 0
      %p187 = por %p185, %p186
      %p188 = scmp.ne.s32.totalorder %s176, %s177
      %p189 = scmp.eq.s32.totalorder %s27, 1
      %p190 = por %p188, %p189
      %p192 = scmp.ne.s32.totalorder %s177, %s191
      %p193 = scmp.eq.s32.totalorder %s27, 0
      %p194 = por %p192, %p193
      %s195 = ssub.s32 %s28, %s40
      %p196 = scmp.eq.s32.totalorder %s195, 0
      %s198 = sadd.s32 %s197, 1
      %s199 = scalar_select %p196, %s197, %s198
      %p202 = pneg %p196
      %p203 = scmp.eq.s32.totalorder %s21, 1
      %p204 = por %p202, %p203
      %p205 = scmp.ne.s32.totalorder %s197, %s200
      %p206 = scmp.eq.s32.totalorder %s21, 0
      %p207 = por %p205, %p206
      %p208 = scmp.ne.s32.totalorder %s197, %s200
      %p209 = scmp.eq.s32.totalorder %s26, 1
      %p210 = por %p208, %p209
      %p211 = scmp.ne.s32.totalorder %s200, %s201
      %p212 = scmp.eq.s32.totalorder %s26, 0
      %p213 = por %p211, %p212
      %p214 = scmp.ne.s32.totalorder %s200, %s201
      %p215 = scmp.eq.s32.totalorder %s27, 1
      %p216 = por %p214, %p215
      %p218 = scmp.ne.s32.totalorder %s201, %s217
      %p219 = scmp.eq.s32.totalorder %s27, 0
      %p220 = por %p218, %p219
      %s221 = ssub.s32 %s28, %s40
      %s222 = ssub.s32 %s29, %s36
      %s223 = sor.u32 %s221, %s222
      %p224 = scmp.eq.s32.totalorder %s223, 0
      %s226 = sadd.s32 %s225, 1
      %s227 = scalar_select %p224, %s225, %s226
      %p230 = pneg %p224
      %p231 = scmp.eq.s32.totalorder %s21, 1
      %p232 = por %p230, %p231
      %p233 = scmp.ne.s32.totalorder %s225, %s228
      %p234 = scmp.eq.s32.totalorder %s21, 0
      %p235 = por %p233, %p234
      %p236 = scmp.ne.s32.totalorder %s225, %s228
      %p237 = scmp.eq.s32.totalorder %s26, 1
      %p238 = por %p236, %p237
      %p239 = scmp.ne.s32.totalorder %s228, %s229
      %p240 = scmp.eq.s32.totalorder %s26, 0
      %p241 = por %p239, %p240
      %p242 = scmp.ne.s32.totalorder %s228, %s229
      %p243 = scmp.eq.s32.totalorder %s27, 1
      %p244 = por %p242, %p243
      %p246 = scmp.ne.s32.totalorder %s229, %s245
      %p247 = scmp.eq.s32.totalorder %s27, 0
      %p248 = por %p246, %p247
      %p249 = scmp.le.s32.totalorder 1, %s21
      %p250 = scmp.lt.s32.totalorder %s21, 3
      %p251 = pnand %p249, %p250
      %p252 = pneg %p251
      // Predicated region
      $region9: #{tpu_custom_call.1} parent=5 // pred_check
        _
      $region10: #{tpu_custom_call.1} parent=5 // pred_check_branch
        %254 = sbr.rel (%p251) target = $region12
      $region11: #{tpu_custom_call.1} parent=5 // pred_region
        %s255 = ssub.s32 %s21, 1
        // Predicated region
        $region13: #{tpu_custom_call.1} parent=11 // pred_check
          %p256 = pneg %p82
        $region14: #{tpu_custom_call.1} parent=11 // pred_check_branch
          %258 = sbr.rel (%p256) target = $region16
        $region15: #{tpu_custom_call.1} parent=11 // pred_region
          _
        $region16: #{tpu_custom_call.1} parent=11 // pred_fallthru
          _
        // Predicated region
        $region17: #{tpu_custom_call.1} parent=11 // pred_check
          %p259 = pneg %p103
        $region18: #{tpu_custom_call.1} parent=11 // pred_check_branch
          %261 = sbr.rel (%p259) target = $region20
        $region19: #{tpu_custom_call.1} parent=11 // pred_region
          _
        $region20: #{tpu_custom_call.1} parent=11 // pred_fallthru
          _
        // Predicated region
        $region21: #{tpu_custom_call.1} parent=11 // pred_check
          %p262 = pneg %p124
        $region22: #{tpu_custom_call.1} parent=11 // pred_check_branch
          %264 = sbr.rel (%p262) target = $region24
        $region23: #{tpu_custom_call.1} parent=11 // pred_region
          _
        $region24: #{tpu_custom_call.1} parent=11 // pred_fallthru
          _
        // Predicated region
        $region25: #{tpu_custom_call.1} parent=11 // pred_check
          %p265 = pneg %p145
        $region26: #{tpu_custom_call.1} parent=11 // pred_check_branch
          %267 = sbr.rel (%p265) target = $region28
        $region27: #{tpu_custom_call.1} parent=11 // pred_region
          _
        $region28: #{tpu_custom_call.1} parent=11 // pred_fallthru
          _
        // Predicated region
        $region29: #{tpu_custom_call.1} parent=11 // pred_check
          %p268 = pneg %p166
        $region30: #{tpu_custom_call.1} parent=11 // pred_check_branch
          %270 = sbr.rel (%p268) target = $region32
        $region31: #{tpu_custom_call.1} parent=11 // pred_region
          _
        $region32: #{tpu_custom_call.1} parent=11 // pred_fallthru
          _
        // Predicated region
        $region33: #{tpu_custom_call.1} parent=11 // pred_check
          %p271 = pneg %p187
        $region34: #{tpu_custom_call.1} parent=11 // pred_check_branch
          %273 = sbr.rel (%p271) target = $region36
        $region35: #{tpu_custom_call.1} parent=11 // pred_region
          _
        $region36: #{tpu_custom_call.1} parent=11 // pred_fallthru
          _
      $region12: #{tpu_custom_call.1} parent=5 // pred_fallthru
        _
      %p274 = scmp.lt.s32.totalorder %s21, 2
      // Predicated region
      $region37: #{tpu_custom_call.1} parent=5 // pred_check
        %p275 = pneg %p274
      $region38: #{tpu_custom_call.1} parent=5 // pred_check_branch
        %277 = sbr.rel (%p275) target = $region40
      $region39: #{tpu_custom_call.1} parent=5 // pred_region
        // Predicated region
        $region41: #{tpu_custom_call.1} parent=39 // pred_check
          %p278 = pneg %p55
        $region42: #{tpu_custom_call.1} parent=39 // pred_check_branch
          %280 = sbr.rel (%p278) target = $region44
        $region43: #{tpu_custom_call.1} parent=39 // pred_region
          %p281 = scmp.lt.s32.totalorder %s28, 1
          %s282 = scalar_select %p281, %s28, 1
          %p283 = scmp.lt.s32.totalorder %s29, 0
          %s284 = scalar_select %p283, %s29, 0
          %s285 = sadd.s32 %s284, %s282
          %s286 = smul.addr %s285, 4
          %s287 = scalar_lea.vmem %s0, %s286
        $region44: #{tpu_custom_call.1} parent=39 // pred_fallthru
          _
      $region40: #{tpu_custom_call.1} parent=5 // pred_fallthru
        _
      %p288 = scmp.le.s32.totalorder 1, %s21
      %p289 = scmp.lt.s32.totalorder %s21, 3
      %p290 = pnand %p288, %p289
      %p291 = pneg %p290
      // Predicated region
      $region45: #{tpu_custom_call.1} parent=5 // pred_check
        _
      $region46: #{tpu_custom_call.1} parent=5 // pred_check_branch
        %293 = sbr.rel (%p290) target = $region48
      $region47: #{tpu_custom_call.1} parent=5 // pred_region
        %s294 = ssub.s32 %s21, 1
        %p295 = scmp.lt.s32.totalorder %s30, 1
        %s296 = scalar_select %p295, %s30, 1
        %p297 = scmp.lt.s32.totalorder %s31, 0
        %s298 = scalar_select %p297, %s31, 0
        %s299 = sadd.s32 %s298, %s296
        %s300 = smul.addr %s299, 4
        %s301 = scalar_lea.vmem %s0, %s300
        %p302 = pneg %p61
        %p303 = pneg %p58
        %p304 = pneg %p82
        %p305 = pneg %p79
        %p306 = pneg %p103
        %p307 = pneg %p100
        %p308 = pneg %p124
        %p309 = pneg %p121
        %p310 = pneg %p145
        %p311 = pneg %p142
        %p312 = pneg %p166
        %p313 = pneg %p163
        %p314 = pneg %p187
        %p315 = pneg %p184
        %p316 = pneg %p213
        %p317 = pneg %p210
        %s318 = sand.u32 %s200, 1
        %s319 = scalar_lea.sflag [#allocation4], %s318
        %s320 = sand.u32 %s200, 1
        %s321 = scalar_lea.vmem [#allocation3], %s320
        %p322 = pneg %p241
        %p323 = pneg %p238
        %s324 = sand.u32 %s228, 1
        %s325 = scalar_lea.sflag [#allocation6], %s324
        %s326 = sand.u32 %s228, 1
        %s327 = smul.addr %s326, 8
        %s328 = scalar_lea.vmem [#allocation5], %s327
        %p329 = scmp.lt.s32.totalorder %s30, 1
        %s330 = scalar_select %p329, %s30, 1
        %p331 = scmp.lt.s32.totalorder %s31, 0
        %s332 = scalar_select %p331, %s31, 0
        %s333 = sadd.s32 %s332, %s330
        %s334 = smul.addr %s333, 4
        %s335 = scalar_lea.vmem %s0, %s334
        %v337 = vld [vmem:[%s335] sm:$0xf]
        %v338 = vld [vmem:[%s5] sm:$0xf]
        %v339 = vld [vmem:[%s5 + $0x4] sm:$0xf]
        %v340 = vld [vmem:[%s5 + $0x8] sm:$0xf]
        %v341 = vld [vmem:[%s5 + $0xc] sm:$0xf]
        %v342 = vld [vmem:[%s6] sm:$0x1]
        %v344 = vlaneseq
        %v345 = vshrl.u32 %v344, 7
        %v346 = vsub.s32 0, %v345
        %v347 = vrot.slane %v342, %v346
        %v353 = vunpack.c.l.b16 %v338
        %v354 = vunpack.c.l.b16 %v339
        %v355 = vunpack.c.l.b16 %v340
        %v356 = vunpack.c.l.b16 %v341
        %v357 = vpack.c.b16 %v354, %v353
        %v358 = vpack.c.b16 %v356, %v355
        %vm361 = vcmask 261120
        %v363 = vsel %vm361, %v337, 0
        %365 = vmatprep.subr.bf16.mxu0 0
        %366 = vmatpush1.bf16.msra.mxu0 0
        %367 = vmatprep.subr.bf16.mxu0 0
        %368 = vmatpush1.bf16.msra.mxu0 0
        %369 = vmatprep.subr.bf16.mxu0 0
        %370 = vmatpush1.bf16.msra.mxu0 0
        %371 = vmatprep.subr.bf16.mxu0 0
        %372 = vmatpush1.bf16.msra.mxu0 0
        %373 = vmatprep.subr.bf16.mxu0 0
        %374 = vmatpush1.bf16.msra.mxu0 0
        %375 = vmatprep.subr.bf16.mxu0 0
        %376 = vmatpush1.bf16.msra.mxu0 0
        %377 = vmatprep.subr.bf16.mxu0 0
        %378 = vmatpush1.bf16.msra.mxu0 %v358
        %379 = vmatprep.subr.bf16.mxu0 0
        %380 = vmatpush1.bf16.msra.mxu0 %v357
        %381 = vmatprep.subr.bf16.mxu0 0
        %382 = vmatpush2.bf16.msra.mxu0 0
        %383 = vmatprep.subr.bf16.mxu0 0
        %384 = vmatpush2.bf16.msra.mxu0 0
        %385 = vmatprep.subr.bf16.mxu0 0
        %386 = vmatpush2.bf16.msra.mxu0 0
        %387 = vmatprep.subr.bf16.mxu0 0
        %388 = vmatpush2.bf16.msra.mxu0 0
        %389 = vmatprep.subr.bf16.mxu0 0
        %390 = vmatpush2.bf16.msra.mxu0 0
        %391 = vmatprep.subr.bf16.mxu0 0
        %392 = vmatpush2.bf16.msra.mxu0 0
        %393 = vmatprep.subr.bf16.mxu0 0
        %394 = vmatpush2.bf16.msra.mxu0 0
        %395 = vmatprep.subr.bf16.mxu0 0
        %396 = vmatpush2.bf16.msra.mxu0 0
        %397 = vmatprep.mubr.bf16.mxu0 0
        %398 = vmatmul.mubr.bf16.gmra.mxu0 %v363
        %v399 = vpop.f32.mrf.mxu0
        %v400 = vadd.f32 %v347, %v399
        %v401 = vpop.f32.mrf.mxu0
        %v402 = vpop.f32.mrf.mxu0
        %v403 = vpop.f32.mrf.mxu0
        %404 = vdwg.mxu0
        %405 = vst [vmem:[%s328] sm:$0xff] %v400
        %p406 = scmp.eq.s32.totalorder %s31, 0
        // Predicated region
        $region49: #{tpu_custom_call.1} parent=47 // pred_check
          %p407 = pneg %p406
        $region50: #{tpu_custom_call.1} parent=47 // pred_check_branch
          %409 = sbr.rel (%p407) target = $region52
        $region51: #{tpu_custom_call.1} parent=47 // pred_region
          %vm410 = vcmask 253952
          %411 = vst.msk [vmem:[#allocation2] sm:$0x1] %vm410, 0.0
        $region52: #{tpu_custom_call.1} parent=47 // pred_fallthru
          _
        %v412 = vld [vmem:[#allocation2] sm:$0x1]
        %v413 = vunpack.c.l.bf16 %v337
        %v414 = vsel %vm361, %v413, 0.0
        %v415 = vrot.slane %v414, 4
        %v416 = vadd.f32 %v414, %v415
        %v417 = vrot.slane %v416, 2
        %v418 = vadd.f32 %v416, %v417
        %v419 = vrot.slane %v418, 1
        %v420 = vadd.f32 %v418, %v419
        %v421 = vadd.f32 %v412, %v420
        %vm422 = vcmask 253952
        %423 = vst.msk [vmem:[#allocation2] sm:$0x1] %vm422, %v421
        // Predicated region
        $region53: #{tpu_custom_call.1} parent=47 // pred_check
          %p424 = pneg %p406
        $region54: #{tpu_custom_call.1} parent=47 // pred_check_branch
          %426 = sbr.rel (%p424) target = $region56
        $region55: #{tpu_custom_call.1} parent=47 // pred_region
          %v427 = vld [vmem:[#allocation2] sm:$0x1]
          %v428 = vmul.f32 %v427, 0.125
          %v429 = vld [vmem:[%s1] sm:$0xff]
          %v430 = vld [vmem:[%s1 + $0x8] sm:$0xff]
          %v431 = vld [vmem:[%s1 + $0x10] sm:$0xff]
          %v432 = vld [vmem:[%s1 + $0x18] sm:$0xff]
          %v433 = vld [vmem:[%s2] sm:$0x1]
          %v435 = vsel %vm361, %v428, 0
          %437 = vmatprep.subr.mxu0 0.0
          %438 = vmatpush1.msra.mxu0 0.0
          %439 = vmatprep.subr.mxu0 0.0
          %440 = vmatpush1.msra.mxu0 0.0
          %441 = vmatprep.subr.mxu0 0.0
          %442 = vmatpush1.msra.mxu0 0.0
          %443 = vmatprep.subr.mxu0 0.0
          %444 = vmatpush1.msra.mxu0 0.0
          %445 = vmatprep.subr.mxu0 0.0
          %446 = vmatpush1.msra.mxu0 0.0
          %447 = vmatprep.subr.mxu0 0.0
          %448 = vmatpush1.msra.mxu0 0.0
          %449 = vmatprep.subr.mxu0 0.0
          %450 = vmatpush1.msra.mxu0 0.0
          %451 = vmatprep.subr.mxu0 0.0
          %452 = vmatpush1.msra.mxu0 0.0
          %453 = vmatprep.subr.mxu0 0.0
          %454 = vmatpush1.msra.mxu0 0.0
          %455 = vmatprep.subr.mxu0 0.0
          %456 = vmatpush1.msra.mxu0 0.0
          %457 = vmatprep.subr.mxu0 0.0
          %458 = vmatpush1.msra.mxu0 0.0
          %459 = vmatprep.subr.mxu0 0.0
          %460 = vmatpush1.msra.mxu0 0.0
          %461 = vmatprep.subr.mxu0 0.0
          %462 = vmatpush1.msra.mxu0 %v432
          %463 = vmatprep.subr.mxu0 0.0
          %464 = vmatpush1.msra.mxu0 %v431
          %465 = vmatprep.subr.mxu0 0.0
          %466 = vmatpush1.msra.mxu0 %v430
          %467 = vmatprep.subr.mxu0 0.0
          %468 = vmatpush1.msra.mxu0 %v429
          %469 = vmatprep.subr.mxu0 0.0
          %470 = vmatpush2.msra.mxu0 0.0
          %471 = vmatprep.subr.mxu0 0.0
          %472 = vmatpush2.msra.mxu0 0.0
          %473 = vmatprep.subr.mxu0 0.0
          %474 = vmatpush2.msra.mxu0 0.0
          %475 = vmatprep.subr.mxu0 0.0
          %476 = vmatpush2.msra.mxu0 0.0
          %477 = vmatprep.subr.mxu0 0.0
          %478 = vmatpush2.msra.mxu0 0.0
          %479 = vmatprep.subr.mxu0 0.0
          %480 = vmatpush2.msra.mxu0 0.0
          %481 = vmatprep.subr.mxu0 0.0
          %482 = vmatpush2.msra.mxu0 0.0
          %483 = vmatprep.subr.mxu0 0.0
          %484 = vmatpush2.msra.mxu0 0.0
          %485 = vmatprep.subr.mxu0 0.0
          %486 = vmatpush2.msra.mxu0 0.0
          %487 = vmatprep.subr.mxu0 0.0
          %488 = vmatpush2.msra.mxu0 0.0
          %489 = vmatprep.subr.mxu0 0.0
          %490 = vmatpush2.msra.mxu0 0.0
          %491 = vmatprep.subr.mxu0 0.0
          %492 = vmatpush2.msra.mxu0 0.0
          %493 = vmatprep.subr.mxu0 0.0
          %494 = vmatpush2.msra.mxu0 0.0
          %495 = vmatprep.subr.mxu0 0.0
          %496 = vmatpush2.msra.mxu0 0.0
          %497 = vmatprep.subr.mxu0 0.0
          %498 = vmatpush2.msra.mxu0 0.0
          %499 = vmatprep.subr.mxu0 0.0
          %500 = vmatpush2.msra.mxu0 0.0
          %501 = vmatprep.mubr.f32.mxu0 0.0
          %502 = vmatmul.mubr.f32.gmra.mxu0 %v435
          %v503 = vpop.f32.mrf.mxu0
          %v504 = vadd.f32 %v433, %v503
          %v505 = vpop.f32.mrf.mxu0
          %506 = vdwg.mxu0
          %v507 = vmax.f32 %v504, 0.0
          %v508 = vld [vmem:[%s3] sm:$0xff]
          %v509 = vld [vmem:[%s3 + $0x8] sm:$0xff]
          %v510 = vld [vmem:[%s4] sm:$0x1]
          %vm511 = vcmask 130048
          %v513 = vsel %vm511, %v507, 0
          %515 = vmatprep.subr.mxu0 0.0
          %516 = vmatpush1.msra.mxu0 0.0
          %517 = vmatprep.subr.mxu0 0.0
          %518 = vmatpush1.msra.mxu0 0.0
          %519 = vmatprep.subr.mxu0 0.0
          %520 = vmatpush1.msra.mxu0 0.0
          %521 = vmatprep.subr.mxu0 0.0
          %522 = vmatpush1.msra.mxu0 0.0
          %523 = vmatprep.subr.mxu0 0.0
          %524 = vmatpush1.msra.mxu0 0.0
          %525 = vmatprep.subr.mxu0 0.0
          %526 = vmatpush1.msra.mxu0 0.0
          %527 = vmatprep.subr.mxu0 0.0
          %528 = vmatpush1.msra.mxu0 0.0
          %529 = vmatprep.subr.mxu0 0.0
          %530 = vmatpush1.msra.mxu0 0.0
          %531 = vmatprep.subr.mxu0 0.0
          %532 = vmatpush1.msra.mxu0 0.0
          %533 = vmatprep.subr.mxu0 0.0
          %534 = vmatpush1.msra.mxu0 0.0
          %535 = vmatprep.subr.mxu0 0.0
          %536 = vmatpush1.msra.mxu0 0.0
          %537 = vmatprep.subr.mxu0 0.0
          %538 = vmatpush1.msra.mxu0 0.0
          %539 = vmatprep.subr.mxu0 0.0
          %540 = vmatpush1.msra.mxu0 0.0
          %541 = vmatprep.subr.mxu0 0.0
          %542 = vmatpush1.msra.mxu0 0.0
          %543 = vmatprep.subr.mxu0 0.0
          %544 = vmatpush1.msra.mxu0 %v509
          %545 = vmatprep.subr.mxu0 0.0
          %546 = vmatpush1.msra.mxu0 %v508
          %547 = vmatprep.subr.mxu0 0.0
          %548 = vmatpush2.msra.mxu0 0.0
          %549 = vmatprep.subr.mxu0 0.0
          %550 = vmatpush2.msra.mxu0 0.0
          %551 = vmatprep.subr.mxu0 0.0
          %552 = vmatpush2.msra.mxu0 0.0
          %553 = vmatprep.subr.mxu0 0.0
          %554 = vmatpush2.msra.mxu0 0.0
          %555 = vmatprep.subr.mxu0 0.0
          %556 = vmatpush2.msra.mxu0 0.0
          %557 = vmatprep.subr.mxu0 0.0
          %558 = vmatpush2.msra.mxu0 0.0
          %559 = vmatprep.subr.mxu0 0.0
          %560 = vmatpush2.msra.mxu0 0.0
          %561 = vmatprep.subr.mxu0 0.0
          %562 = vmatpush2.msra.mxu0 0.0
          %563 = vmatprep.subr.mxu0 0.0
          %564 = vmatpush2.msra.mxu0 0.0
          %565 = vmatprep.subr.mxu0 0.0
          %566 = vmatpush2.msra.mxu0 0.0
          %567 = vmatprep.subr.mxu0 0.0
          %568 = vmatpush2.msra.mxu0 0.0
          %569 = vmatprep.subr.mxu0 0.0
          %570 = vmatpush2.msra.mxu0 0.0
          %571 = vmatprep.subr.mxu0 0.0
          %572 = vmatpush2.msra.mxu0 0.0
          %573 = vmatprep.subr.mxu0 0.0
          %574 = vmatpush2.msra.mxu0 0.0
          %575 = vmatprep.subr.mxu0 0.0
          %576 = vmatpush2.msra.mxu0 0.0
          %577 = vmatprep.subr.mxu0 0.0
          %578 = vmatpush2.msra.mxu0 0.0
          %579 = vmatprep.mubr.f32.mxu0 0.0
          %580 = vmatmul.mubr.f32.gmra.mxu0 %v513
          %v581 = vpop.f32.mrf.mxu0
          %v582 = vadd.f32 %v510, %v581
          %v583 = vpop.f32.mrf.mxu0
          %584 = vdwg.mxu0
          %585 = vst [vmem:[%s321] sm:$0x1] %v582
        $region56: #{tpu_custom_call.1} parent=47 // pred_fallthru
          _
        %s586 = sand.u32 %s200, 1
        %s587 = scalar_lea.sflag [#allocation4], %s586
        %s588 = sand.u32 %s200, 1
        %s589 = scalar_lea.vmem [#allocation3], %s588
        %s590 = sand.u32 %s228, 1
        %s591 = scalar_lea.sflag [#allocation6], %s590
        %s592 = sand.u32 %s228, 1
        %s593 = smul.addr %s592, 8
        %s594 = scalar_lea.vmem [#allocation5], %s593
        // Predicated region
        $region57: #{tpu_custom_call.1} parent=47 // pred_check
          %p595 = pneg %p210
        $region58: #{tpu_custom_call.1} parent=47 // pred_check_branch
          %597 = sbr.rel (%p595) target = $region60
        $region59: #{tpu_custom_call.1} parent=47 // pred_region
          %s599 = ssub.s32 16, 16
          %600 = vsyncadd %s587, %s599
          %s601 = smul.addr %s30, 16
          %s602 = scalar_lea.hbm %s7, %s601
          %s604 = sshll.u32 %s589, 4
          %s605 = int_to_ptr.vmem [resolvable:$true] %s604
          %607 = dma.vmem_to_hbm [thread:$0]  %s605, 16, %s602, %s587
        $region60: #{tpu_custom_call.1} parent=47 // pred_fallthru
          _
        // Predicated region
        $region61: #{tpu_custom_call.1} parent=47 // pred_check
          %p608 = pneg %p238
        $region62: #{tpu_custom_call.1} parent=47 // pred_check_branch
          %610 = sbr.rel (%p608) target = $region64
        $region63: #{tpu_custom_call.1} parent=47 // pred_region
          %s612 = ssub.s32 128, 128
          %613 = vsyncadd %s591, %s612
          %s614 = sadd.s32 %s31, %s30
          %s615 = smul.addr %s614, 128
          %s616 = scalar_lea.hbm %s8, %s615
          %s618 = sshll.u32 %s594, 4
          %s619 = int_to_ptr.vmem [resolvable:$true] %s618
          %621 = dma.vmem_to_hbm [thread:$0]  %s619, 128, %s616, %s591
        $region64: #{tpu_custom_call.1} parent=47 // pred_fallthru
          _
      $region48: #{tpu_custom_call.1} parent=5 // pred_fallthru
        _
      %p622 = scmp.le.s32.totalorder 2, %s21
      // Predicated region
      $region65: #{tpu_custom_call.1} parent=5 // pred_check
        %p623 = pneg %p622
      $region66: #{tpu_custom_call.1} parent=5 // pred_check_branch
        %625 = sbr.rel (%p623) target = $region68
      $region67: #{tpu_custom_call.1} parent=5 // pred_region
        %s626 = ssub.s32 %s21, 2
        // Predicated region
        $region69: #{tpu_custom_call.1} parent=67 // pred_check
          %p627 = pneg %p216
        $region70: #{tpu_custom_call.1} parent=67 // pred_check_branch
          %629 = sbr.rel (%p627) target = $region72
        $region71: #{tpu_custom_call.1} parent=67 // pred_region
          %s630 = sand.u32 %s201, 1
          %s631 = scalar_lea.sflag [#allocation4], %s630
          %s632 = sand.u32 %s201, 1
          %s633 = scalar_lea.vmem [#allocation3], %s632
          %634 = dma.done %s631, 16
        $region72: #{tpu_custom_call.1} parent=67 // pred_fallthru
          _
        // Predicated region
        $region73: #{tpu_custom_call.1} parent=67 // pred_check
          %p635 = pneg %p244
        $region74: #{tpu_custom_call.1} parent=67 // pred_check_branch
          %637 = sbr.rel (%p635) target = $region76
        $region75: #{tpu_custom_call.1} parent=67 // pred_region
          %s638 = sand.u32 %s229, 1
          %s639 = scalar_lea.sflag [#allocation6], %s638
          %s640 = sand.u32 %s229, 1
          %s641 = smul.addr %s640, 8
          %s642 = scalar_lea.vmem [#allocation5], %s641
          %643 = dma.done %s639, 128
        $region76: #{tpu_custom_call.1} parent=67 // pred_fallthru
          _
      $region68: #{tpu_custom_call.1} parent=5 // pred_fallthru
        _
    $region6: #{tpu_custom_call.1} parent=1 // loop_footer
      %s25 = sadd.s32 1, %s21
    $region7: #{tpu_custom_call.1} parent=1 // loop_footer_branch
      %20 = sbr.rel target = $region3
    $region8: #{tpu_custom_call.1} parent=1 // loop_exit
      _
    %644 = vsyncpa [#allocation4], 1
    %s645 = scalar_lea.sflag [#allocation4], 1
    %646 = vsyncpa %s645, 1
    %647 = vsyncpa [#allocation6], 1
    %s648 = scalar_lea.sflag [#allocation6], 1
    %649 = vsyncpa %s648, 1

</llo_original>
